<compile_context>
chip_gen: v6e
topology: v6e:2x2x1
jax: 0.10.0
libtpu: 0.0.40
codegen_flags: <defaults>
</compile_context>

<pallas_src>
import functools
import math

import jax
import jax.numpy as jnp
from jax.experimental import pallas as pl
from jax.experimental.pallas import tpu as pltpu


def timestep_embedding_kernel(t_ref, freq_ref, w1_ref, b1_ref, w2_ref, b2_ref,
                              o_ref, h_ref, *, half):
    """One grid step writes one (tile_b, tile_n) tile of the output.

    grid = (B // tile_b, E // tile_n); axis 0 (batch) is parallel, axis 1 walks
    output-column tiles of the second Linear while `h` stays resident in VMEM.
    """
    j = pl.program_id(1)

    # h = Swish(pe @ W1 + b1): computed once per batch tile, kept in VMEM scratch.
    @pl.when(j == 0)
    def _():
        t = t_ref[...]                                   # (tb, 1) f32
        arg = t * freq_ref[...]                          # (tb, half) f32 broadcast
        # No lane-axis concat: split the first matmul over the sin/cos halves.
        s = jnp.sin(arg).astype(w1_ref.dtype)
        c = jnp.cos(arg).astype(w1_ref.dtype)
        h = jnp.dot(s, w1_ref[:half, :], preferred_element_type=jnp.float32)
        h = h + jnp.dot(c, w1_ref[half:, :], preferred_element_type=jnp.float32)
        h = h + b1_ref[...]
        h_ref[...] = h * jax.nn.sigmoid(h)               # Swish in f32

    out = jnp.dot(h_ref[...].astype(w2_ref.dtype), w2_ref[...],
                  preferred_element_type=jnp.float32) + b2_ref[...]
    o_ref[...] = out.astype(o_ref.dtype)


def timestep_embedding(t, w1, b1, w2, b2, *, channels,
                       mxu_dtype=jnp.bfloat16, tile_b=None, tile_n=None):
    """t: (B,) float32 timesteps. Returns (B, embedding_channels) float32."""
    t2 = t.reshape(-1, 1).astype(jnp.float32)
    B = t2.shape[0]
    C, E = w1.shape
    assert C == channels, "w1.shape[0] must equal `channels`"
    assert channels % 2 == 0, "sinusoidal encoding needs an even channel count"
    assert w2.shape == (E, E)
    half = channels // 2

    # Trace-time constant frequency table: 10000 ** (-i / (half - 1)).
    denom = float(max(half - 1, 1))          # guard channels == 2
    i = jnp.arange(half, dtype=jnp.float32)
    freq = jnp.exp(-(i / denom) * math.log(10000.0)).reshape(1, half)

    # bf16 MXU operands (weights pre-cast -> half the weight HBM traffic);
    # biases and all elementwise math remain f32.
    w1c = w1.astype(mxu_dtype)
    w2c = w2.astype(mxu_dtype)
    b1c = b1.reshape(1, E).astype(jnp.float32)
    b2c = b2.reshape(1, E).astype(jnp.float32)

    if tile_b is None:
        tile_b = B if B <= 256 else 256
    if tile_n is None:
        tile_n = E if E <= 512 else 512
    assert B % tile_b == 0 and E % tile_n == 0

    grid = (B // tile_b, E // tile_n)
    kernel = functools.partial(timestep_embedding_kernel, half=half)

    return pl.pallas_call(
        kernel,
        out_shape=jax.ShapeDtypeStruct((B, E), jnp.float32),
        grid=grid,
        in_specs=[
            pl.BlockSpec((tile_b, 1), lambda b, j: (b, 0)),      # t
            pl.BlockSpec((1, half), lambda b, j: (0, 0)),        # freq (constant)
            pl.BlockSpec((C, E), lambda b, j: (0, 0)),           # w1 (resident)
            pl.BlockSpec((1, E), lambda b, j: (0, 0)),           # b1 (resident)
            pl.BlockSpec((E, tile_n), lambda b, j: (0, j)),      # w2 column tile (pipelined)
            pl.BlockSpec((1, tile_n), lambda b, j: (0, j)),      # b2 column tile
        ],
        out_specs=pl.BlockSpec((tile_b, tile_n), lambda b, j: (b, j)),
        scratch_shapes=[pltpu.VMEM((tile_b, E), jnp.float32)],   # h, reused over j
        compiler_params=pltpu.CompilerParams(
            dimension_semantics=("parallel", "arbitrary")),
    )(t2, freq, w1c, b1c, w2c, b2c)


def reference(t, w1, b1, w2, b2, *, channels):
    """Pure-JAX f32 reference matching the PyTorch module."""
    t2 = t.reshape(-1, 1).astype(jnp.float32)
    half = channels // 2
    i = jnp.arange(half, dtype=jnp.float32)
    freq = jnp.power(10000.0, -(i / (half - 1))).reshape(1, -1)
    arg = t2 * freq
    pe = jnp.concatenate([jnp.sin(arg), jnp.cos(arg)], axis=1)
    h = pe @ w1 + b1
    h = h * jax.nn.sigmoid(h)
    return h @ w2 + b2


if __name__ == "__main__":
    B = 8            # batch of timesteps
    channels = 32    # sinusoidal encoding dim (must be even)
    emb = 128        # embedding_channels (multiple of 128 -> lane-dense output store)

    key = jax.random.PRNGKey(0)
    k_t, k_w1, k_b1, k_w2, k_b2 = jax.random.split(key, 5)

    t = jax.random.uniform(k_t, (B,), jnp.float32, minval=0.0, maxval=1000.0)
    # deterministic synthetic params; stored (in, out) so kernel does x @ W + b
    w1 = 0.05 * jax.random.normal(k_w1, (channels, emb), jnp.float32)
    b1 = 0.05 * jax.random.normal(k_b1, (1, emb), jnp.float32)
    w2 = 0.05 * jax.random.normal(k_w2, (emb, emb), jnp.float32)
    b2 = 0.05 * jax.random.normal(k_b2, (1, emb), jnp.float32)

    ref = reference(t, w1, b1, w2, b2, channels=channels)

    # 1) f32-MXU path: must match the reference tightly.
    out_f32 = timestep_embedding(t, w1, b1, w2, b2, channels=channels,
                                 mxu_dtype=jnp.float32)
    out_f32 = jax.block_until_ready(out_f32)
    assert out_f32.shape == (B, emb)
    assert jnp.allclose(out_f32, ref, atol=1e-4, rtol=1e-4), "f32 mismatch vs reference"

    # 2) default bf16-MXU path (production config): loose tolerance vs f32 reference.
    out_bf16 = timestep_embedding(t, w1, b1, w2, b2, channels=channels)
    out_bf16 = jax.block_until_ready(out_bf16)
    assert out_bf16.shape == (B, emb)
    assert jnp.allclose(out_bf16, ref, atol=5e-2, rtol=5e-2), "bf16 mismatch vs reference"

    print("KERNEL_OK")
</pallas_src>

<mosaic_0001>
module attributes {stable_mosaic.version = 11 : i64} {
  func.func @timestep_embedding_kernel(%arg0: i32, %arg1: i32, %arg2: memref<8x1xf32, #tpu.memory_space<vmem>>, %arg3: memref<1x16xf32, #tpu.memory_space<vmem>>, %arg4: memref<32x128xf32, #tpu.memory_space<vmem>>, %arg5: memref<1x128xf32, #tpu.memory_space<vmem>>, %arg6: memref<128x128xf32, #tpu.memory_space<vmem>>, %arg7: memref<1x128xf32, #tpu.memory_space<vmem>>, %arg8: memref<8x128xf32, #tpu.memory_space<vmem>>, %arg9: memref<8x128xf32, #tpu.memory_space<vmem>>) attributes {dimension_semantics = [#tpu.dimension_semantics<parallel>, #tpu.dimension_semantics<arbitrary>], iteration_bounds = array<i64: 1, 1>, scalar_prefetch = 0 : i64, scratch_operands = 1 : i64, tpu.core_type = #tpu.core_type<tc>, window_params = [{transform_indices = @transform_0, window_bounds = array<i64: 8, 1>}, {pipeline_mode = #tpu.pipeline_mode<synchronous>, transform_indices = @transform_1, window_bounds = array<i64: 1, 16>}, {pipeline_mode = #tpu.pipeline_mode<synchronous>, transform_indices = @transform_2, window_bounds = array<i64: 32, 128>}, {pipeline_mode = #tpu.pipeline_mode<synchronous>, transform_indices = @transform_3, window_bounds = array<i64: 1, 128>}, {transform_indices = @transform_4, window_bounds = array<i64: 128, 128>}, {transform_indices = @transform_5, window_bounds = array<i64: 1, 128>}, {transform_indices = @transform_6, window_bounds = array<i64: 8, 128>}]} {
    %c0_i32 = arith.constant 0 : i32
    %0 = arith.cmpi eq, %arg1, %c0_i32 : i32
    %1 = arith.extui %0 : i1 to i32
    %c0_i32_0 = arith.constant 0 : i32
    %2 = arith.cmpi ne, %1, %c0_i32_0 : i32
    scf.if %2 {
      %c0_8 = arith.constant 0 : index
      %c0_9 = arith.constant 0 : index
      %10 = vector.load %arg2[%c0_8, %c0_9] : memref<8x1xf32, #tpu.memory_space<vmem>>, vector<8x1xf32>
      %c0_10 = arith.constant 0 : index
      %c0_11 = arith.constant 0 : index
      %11 = vector.load %arg3[%c0_10, %c0_11] : memref<1x16xf32, #tpu.memory_space<vmem>>, vector<1x16xf32>
      %12 = vector.broadcast %10 : vector<8x1xf32> to vector<8x16xf32>
      %13 = vector.broadcast %11 : vector<1x16xf32> to vector<8x16xf32>
      %14 = arith.mulf %12, %13 : vector<8x16xf32>
      %15 = math.sin %14 : vector<8x16xf32>
      %16 = math.cos %14 : vector<8x16xf32>
      %c0_12 = arith.constant 0 : index
      %c0_13 = arith.constant 0 : index
      %17 = vector.load %arg4[%c0_12, %c0_13] : memref<32x128xf32, #tpu.memory_space<vmem>>, vector<16x128xf32>
      %cst_14 = arith.constant dense<0.000000e+00> : vector<8x128xf32>
      %18 = tpu.matmul %15, %17, %cst_14 {dimension_numbers = #tpu.dot_dimension_numbers<[1], [0], [0], [1], [0, 0, 1, 1], [], []>} : vector<8x16xf32>, vector<16x128xf32>, vector<8x128xf32> -> vector<8x128xf32>
      %c16 = arith.constant 16 : index
      %c0_15 = arith.constant 0 : index
      %19 = vector.load %arg4[%c16, %c0_15] : memref<32x128xf32, #tpu.memory_space<vmem>>, vector<16x128xf32>
      %cst_16 = arith.constant dense<0.000000e+00> : vector<8x128xf32>
      %20 = tpu.matmul %16, %19, %cst_16 {dimension_numbers = #tpu.dot_dimension_numbers<[1], [0], [0], [1], [0, 0, 1, 1], [], []>} : vector<8x16xf32>, vector<16x128xf32>, vector<8x128xf32> -> vector<8x128xf32>
      %21 = arith.addf %18, %20 : vector<8x128xf32>
      %c0_17 = arith.constant 0 : index
      %c0_18 = arith.constant 0 : index
      %22 = vector.load %arg5[%c0_17, %c0_18] : memref<1x128xf32, #tpu.memory_space<vmem>>, vector<1x128xf32>
      %23 = vector.broadcast %22 : vector<1x128xf32> to vector<8x128xf32>
      %24 = arith.addf %21, %23 : vector<8x128xf32>
      %25 = arith.negf %24 : vector<8x128xf32>
      %26 = math.exp %25 : vector<8x128xf32>
      %cst_19 = arith.constant 1.000000e+00 : f32
      %27 = vector.broadcast %cst_19 : f32 to vector<8x128xf32>
      %28 = arith.addf %27, %26 : vector<8x128xf32>
      %29 = arith.divf %27, %28 : vector<8x128xf32>
      %30 = arith.mulf %24, %29 : vector<8x128xf32>
      %c0_20 = arith.constant 0 : index
      %c0_21 = arith.constant 0 : index
      %31 = vector.load %arg9[%c0_20, %c0_21] : memref<8x128xf32, #tpu.memory_space<vmem>>, vector<8x128xf32>
      tpu.vector_store %arg9[%c0_20, %c0_21], %30 {strides = array<i32>} : memref<8x128xf32, #tpu.memory_space<vmem>>, vector<8x128xf32>,
    } else {
    }
    %c0 = arith.constant 0 : index
    %c0_1 = arith.constant 0 : index
    %3 = vector.load %arg9[%c0, %c0_1] : memref<8x128xf32, #tpu.memory_space<vmem>>, vector<8x128xf32>
    %c0_2 = arith.constant 0 : index
    %c0_3 = arith.constant 0 : index
    %4 = vector.load %arg6[%c0_2, %c0_3] : memref<128x128xf32, #tpu.memory_space<vmem>>, vector<128x128xf32>
    %cst = arith.constant dense<0.000000e+00> : vector<8x128xf32>
    %5 = tpu.matmul %3, %4, %cst {dimension_numbers = #tpu.dot_dimension_numbers<[1], [0], [0], [1], [0, 0, 1, 1], [], []>} : vector<8x128xf32>, vector<128x128xf32>, vector<8x128xf32> -> vector<8x128xf32>
    %c0_4 = arith.constant 0 : index
    %c0_5 = arith.constant 0 : index
    %6 = vector.load %arg7[%c0_4, %c0_5] : memref<1x128xf32, #tpu.memory_space<vmem>>, vector<1x128xf32>
    %7 = vector.broadcast %6 : vector<1x128xf32> to vector<8x128xf32>
    %8 = arith.addf %5, %7 : vector<8x128xf32>
    %c0_6 = arith.constant 0 : index
    %c0_7 = arith.constant 0 : index
    %9 = vector.load %arg8[%c0_6, %c0_7] : memref<8x128xf32, #tpu.memory_space<vmem>>, vector<8x128xf32>
    tpu.vector_store %arg8[%c0_6, %c0_7], %8 {strides = array<i32>} : memref<8x128xf32, #tpu.memory_space<vmem>>, vector<8x128xf32>,
    return
  }
  func.func @transform_0(%arg0: i32, %arg1: i32) -> (i32, i32) {
    %c0_i32 = arith.constant 0 : i32
    %c0_i32_0 = arith.constant 0 : i32
    return %arg0, %c0_i32 : i32, i32
  }
  func.func @transform_1(%arg0: i32, %arg1: i32) -> (i32, i32) {
    %c0_i32 = arith.constant 0 : i32
    %c0_i32_0 = arith.constant 0 : i32
    %c0_i32_1 = arith.constant 0 : i32
    return %c0_i32, %c0_i32_0 : i32, i32
  }
  func.func @transform_2(%arg0: i32, %arg1: i32) -> (i32, i32) {
    %c0_i32 = arith.constant 0 : i32
    %c0_i32_0 = arith.constant 0 : i32
    %c0_i32_1 = arith.constant 0 : i32
    return %c0_i32, %c0_i32_0 : i32, i32
  }
  func.func @transform_3(%arg0: i32, %arg1: i32) -> (i32, i32) {
    %c0_i32 = arith.constant 0 : i32
    %c0_i32_0 = arith.constant 0 : i32
    %c0_i32_1 = arith.constant 0 : i32
    return %c0_i32, %c0_i32_0 : i32, i32
  }
  func.func @transform_4(%arg0: i32, %arg1: i32) -> (i32, i32) {
    %c0_i32 = arith.constant 0 : i32
    %c0_i32_0 = arith.constant 0 : i32
    return %c0_i32, %arg1 : i32, i32
  }
  func.func @transform_5(%arg0: i32, %arg1: i32) -> (i32, i32) {
    %c0_i32 = arith.constant 0 : i32
    %c0_i32_0 = arith.constant 0 : i32
    return %c0_i32, %arg1 : i32, i32
  }
  func.func @transform_6(%arg0: i32, %arg1: i32) -> (i32, i32) {
    %c0_i32 = arith.constant 0 : i32
    return %arg0, %arg1 : i32, i32
  }
}

</mosaic_0001>

<llo_original>
// kernel: tpu_custom_call.1
$region0: #{tpu_custom_call.1}
  #allocation0 [shape = 'u32[]', space=smem, size = 0x4, offset = 0x4, fixed_abs, tag = 'smem constant byte address 0x4 - core index']
  #allocation1 [shape = 'u32[144,128]{1,0:T(1,128)}', space=vmem, size = 0x12000, scoped, tag = 'internal scratch']
  #allocation2 [shape = 'f32[8,128]{1,0:T(8,128)}', space=vmem, size = 0x1000, scoped, tag = 'scratch operand']
  %s0 = inlined_call_operand.vmem [shape: f32[8,1], index: 0, kind: input, shape index: {}]
  %s1 = inlined_call_operand.vmem [shape: f32[1,16], index: 1, kind: input, shape index: {}]
  %s2 = inlined_call_operand.hbm [shape: f32[32,128], index: 2, kind: input, shape index: {}]
  %s3 = inlined_call_operand.vmem [shape: f32[1,128], index: 3, kind: input, shape index: {}]
  %s4 = inlined_call_operand.hbm [shape: f32[128,128], index: 4, kind: input, shape index: {}]
  %s5 = inlined_call_operand.vmem [shape: f32[1,128], index: 5, kind: input, shape index: {}]
  %s6 = inlined_call_operand.hbm [shape: f32[8,128], index: 6, kind: output, shape index: {}]
  %s7 = sld [smem:[#allocation0]]
  $region46: #{tpu_custom_call.1} parent=0
    _
  %s9 = ssub.s32 1, %s7
  %s10 = scalar_select 0, %s9, %s7
  $region1: #{tpu_custom_call.1} parent=0
    #allocation3 [shape = 'u8[16384]{0}', space=vmem, size = 0x4000, scoped, tag = 'input window, operand 2, single buffered']
    #allocation4 [shape = 's32[1]{0}', space=sflag, size = 0x4, scoped, tag = 'scoped memory for tpu_custom_call.1']
    #allocation5 [shape = 's32[1]{0}', space=sflag, size = 0x4, scoped, tag = 'scoped memory for tpu_custom_call.1']
    #allocation6 [shape = 'u8[65536]{0}', space=vmem, size = 0x10000, scoped, tag = 'input window, operand 4, single buffered']
    #allocation7 [shape = 's32[1]{0}', space=sflag, size = 0x4, scoped, tag = 'scoped memory for tpu_custom_call.1']
    #allocation8 [shape = 'u8[4096]{0}', space=vmem, size = 0x1000, scoped, tag = 'output window, operand 0, single buffered']
    %11 = vsyncpa [#allocation4], 0
    %12 = vsyncpa [#allocation7], 0
    %13 = vsyncpa [#allocation5], 0
    // Predicated region
    $region2: #{tpu_custom_call.1} parent=1 // pred_check
      _
    $region3: #{tpu_custom_call.1} parent=1 // pred_check_branch
      %15 = sbr.rel (0) target = $region5
    $region4: #{tpu_custom_call.1} parent=1 // pred_region
      _
    $region5: #{tpu_custom_call.1} parent=1 // pred_fallthru
      _
    // Predicated region
    $region6: #{tpu_custom_call.1} parent=1 // pred_check
      _
    $region7: #{tpu_custom_call.1} parent=1 // pred_check_branch
      %17 = sbr.rel (0) target = $region9
    $region8: #{tpu_custom_call.1} parent=1 // pred_region
      _
    $region9: #{tpu_custom_call.1} parent=1 // pred_fallthru
      _
    // Predicated region
    $region10: #{tpu_custom_call.1} parent=1 // pred_check
      _
    $region11: #{tpu_custom_call.1} parent=1 // pred_check_branch
      %19 = sbr.rel (0) target = $region13
    $region12: #{tpu_custom_call.1} parent=1 // pred_region
      %s21 = ssub.s32 512, 512
      %22 = vsyncadd [#allocation4], %s21
      %s23 = sshll.u32 [#allocation3], 4
      %s24 = int_to_ptr.vmem [resolvable:$true] %s23
      %29 = dma.hbm_to_vmem [thread:$0]  %s2, 512, %s24, [#allocation4], 128, 128, 8
    $region13: #{tpu_custom_call.1} parent=1 // pred_fallthru
      _
    // Predicated region
    $region14: #{tpu_custom_call.1} parent=1 // pred_check
      _
    $region15: #{tpu_custom_call.1} parent=1 // pred_check_branch
      %31 = sbr.rel (0) target = $region17
    $region16: #{tpu_custom_call.1} parent=1 // pred_region
      _
    $region17: #{tpu_custom_call.1} parent=1 // pred_fallthru
      _
    // Predicated region
    $region18: #{tpu_custom_call.1} parent=1 // pred_check
      _
    $region19: #{tpu_custom_call.1} parent=1 // pred_check_branch
      %33 = sbr.rel (0) target = $region21
    $region20: #{tpu_custom_call.1} parent=1 // pred_region
      %s35 = ssub.s32 2048, 2048
      %36 = vsyncadd [#allocation7], %s35
      %s37 = sshll.u32 [#allocation6], 4
      %s38 = int_to_ptr.vmem [resolvable:$true] %s37
      %43 = dma.hbm_to_vmem [thread:$0]  %s4, 2048, %s38, [#allocation7], 128, 128, 8
    $region21: #{tpu_custom_call.1} parent=1 // pred_fallthru
      _
    // Predicated region
    $region22: #{tpu_custom_call.1} parent=1 // pred_check
      _
    $region23: #{tpu_custom_call.1} parent=1 // pred_check_branch
      %45 = sbr.rel (0) target = $region25
    $region24: #{tpu_custom_call.1} parent=1 // pred_region
      _
    $region25: #{tpu_custom_call.1} parent=1 // pred_fallthru
      _
    // Predicated region
    $region26: #{tpu_custom_call.1} parent=1 // pred_check
      _
    $region27: #{tpu_custom_call.1} parent=1 // pred_check_branch
      %47 = sbr.rel (0) target = $region29
    $region28: #{tpu_custom_call.1} parent=1 // pred_region
      %48 = dma.done [#allocation4], 512
    $region29: #{tpu_custom_call.1} parent=1 // pred_fallthru
      _
    // Predicated region
    $region30: #{tpu_custom_call.1} parent=1 // pred_check
      _
    $region31: #{tpu_custom_call.1} parent=1 // pred_check_branch
      %50 = sbr.rel (0) target = $region33
    $region32: #{tpu_custom_call.1} parent=1 // pred_region
      %51 = dma.done [#allocation7], 2048
    $region33: #{tpu_custom_call.1} parent=1 // pred_fallthru
      _
    %p52 = scmp.eq.s32.totalorder 0, 0
    // Predicated region
    $region34: #{tpu_custom_call.1} parent=1 // pred_check
      %p53 = pneg %p52
    $region35: #{tpu_custom_call.1} parent=1 // pred_check_branch
      %55 = sbr.rel (%p53) target = $region37
    $region36: #{tpu_custom_call.1} parent=1 // pred_region
      %v56 = vld [vmem:[%s0] sm:$0xff]
      %v57 = vld [vmem:[%s1] sm:$0x1]
      %59 = vset.pattern.permute.xlu0 0
      %60 = vperm.xlu0 %59, %v56
      %v61 = vpop.permute.xlu0 %60
      %v64 = vlaneseq
      %v65 = vshrl.u32 %v64, 7
      %v66 = vsub.s32 0, %v65
      %v67 = vrot.slane %v57, %v66
      %v69 = vmul.f32 %v61, %v67
      %v70 = vand.u32 2147483647, %v69
      %vm71 = vcmp.le.f32.partialorder %v70, 0.7853982
      %vm72 = vcmp.lt.s32.totalorder %v69, 0
      %v73 = vand.u32 %v69, 2139095040
      %v74 = vshrl.u32 %v73, 23
      %v75 = vsub.s32 %v74, 127
      %v76 = vand.u32 2147483647, %v69
      %v77 = vand.u32 %v76, 8388607
      %v78 = vor.u32 %v77, 8388608
      %v79 = vsub.s32 0, %v78
      %v80 = vadd.s32 %v75, 1
      %vm81 = vcmp.gt.s32.totalorder %v80, 0
      %v82 = vsel %vm81, %v80, 0
      %v83 = vshrl.u32 %v82, 5
      %v84 = vand.u32 %v82, 31
      %v85 = vsub.s32 32, %v84
      %v86 = vshrl.u32 683565275, %v85
      %v87 = vshll.u32 683565275, %v84
      %v88 = vshrl.u32 2475754826, %v85
      %v89 = vor.u32 %v87, %v88
      %v90 = vshll.u32 2475754826, %v84
      %v91 = vshrl.u32 2131351028, %v85
      %v92 = vor.u32 %v90, %v91
      %v93 = vshll.u32 2131351028, %v84
      %v94 = vshrl.u32 2102212464, %v85
      %v95 = vor.u32 %v93, %v94
      %v96 = vshll.u32 2102212464, %v84
      %v97 = vshrl.u32 920167782, %v85
      %v98 = vor.u32 %v96, %v97
      %v99 = vshll.u32 920167782, %v84
      %v100 = vshrl.u32 1326507024, %v85
      %v101 = vor.u32 %v99, %v100
      %vm102 = vcmp.lt.s32.totalorder %v83, 1
      %vm103 = vcmp.lt.s32.totalorder %v83, 2
      %vm104 = vcmp.lt.s32.totalorder %v83, 3
      %vm105 = vcmp.lt.s32.totalorder %v83, 4
      %v106 = vsel %vm102, %v86, %v89
      %v107 = vsel %vm105, %v95, 2102212464
      %v108 = vsel %vm104, %v92, %v107
      %v109 = vsel %vm103, %v106, %v108
      %v110 = vsel %vm102, %v89, %v92
      %v111 = vsel %vm105, %v98, 920167782
      %v112 = vsel %vm104, %v95, %v111
      %v113 = vsel %vm103, %v110, %v112
      %v114 = vsel %vm102, %v92, %v95
      %v115 = vsel %vm105, %v101, 1326507024
      %v116 = vsel %vm104, %v98, %v115
      %v117 = vsel %vm103, %v114, %v116
      %v118 = vshll.u32 %v78, 8
      %v119 = vmul.u32.u64.compose %v118, %v117
      %v120 = vextract.low.u32 %v119
      %v121 = vextract.high.u32 %v119
      %v122 = vmul.u32.u64.compose %v118, %v113
      %v123 = vextract.low.u32 %v122
      %v124 = vextract.high.u32 %v122
      %v125 = vmul.u32 %v118, %v109
      %v126 = vadd.s32 %v121, %v123
      %vm127 = vc.u32 %v121, %v123
      %v128 = vadd.s32 %v124, 1
      %v129 = vsel %vm127, %v128, %v124
      %v130 = vadd.s32 %v125, %v129
      %v131 = vadd.s32 %v130, 536870912
      %v132 = vshrl.u32 %v131, 30
      %v133 = vshll.u32 %v132, 30
      %v134 = vsub.s32 %v130, %v133
      %vm135 = vcmp.lt.s32.totalorder %v134, 0
      %v136 = vsub.s32 0, %v134
      %v137 = vsel %vm135, %v136, %v134
      %v138 = vclz %v137
      %v139 = vsub.s32 %v138, 2
      %vm140 = vcmp.gt.s32.totalorder 0, %v139
      %v141 = vsel %vm140, 0, %v139
      %v142 = vsub.s32 32, %v141
      %v143 = vshll.u32 %v134, %v141
      %v144 = vshrl.u32 %v126, %v142
      %v145 = vor.u32 %v143, %v144
      %v146 = vsub.s32 4294967266, %v141
      %v147 = vadd.s32 %v146, 127
      %v148 = vshll.u32 %v147, 23
      %v149 = vor.u32 4788187, %v148
      %v150 = vand.u32 2147483647, %v149
      %v152 = vcvt.s32.f32 %v145
      %v153 = vmul.f32 %v152, %v150
      %v154 = vxor.u32 %v153, 2147483648
      %v155 = vsel %vm72, %v154, %v153
      %v156 = vsub.s32 4, %v132
      %v157 = vsel %vm72, %v156, %v132
      %v158 = vsel %vm71, %v69, %v155
      %v159 = vsel %vm71, 0, %v157
      %v160 = vcosq.f32.pop %v158
      %v161 = vsinq.f32.pop %v158
      %vm162 = vweird.f32 %v69
      %v163 = vadd.s32 %v159, 3
      %v164 = vand.u32 %v163, 3
      %vm165 = vcmp.lt.s32.totalorder %v164, 2
      %vm166 = vcmp.eq.s32.totalorder %v164, 0
      %v167 = vxor.u32 %v161, 2147483648
      %v168 = vsel %vm166, %v160, %v167
      %vm169 = vcmp.eq.s32.totalorder %v164, 2
      %v170 = vxor.u32 %v160, 2147483648
      %v171 = vsel %vm169, %v170, %v161
      %v172 = vsel %vm165, %v168, %v171
      %v173 = vsel %vm162, nan, %v172
      %v174 = vand.u32 2147483647, %v69
      %vm175 = vcmp.le.f32.partialorder %v174, 0.7853982
      %vm176 = vcmp.lt.s32.totalorder %v69, 0
      %v177 = vand.u32 %v69, 2139095040
      %v178 = vshrl.u32 %v177, 23
      %v179 = vsub.s32 %v178, 127
      %v180 = vand.u32 2147483647, %v69
      %v181 = vand.u32 %v180, 8388607
      %v182 = vor.u32 %v181, 8388608
      %v183 = vsub.s32 0, %v182
      %v184 = vadd.s32 %v179, 1
      %vm185 = vcmp.gt.s32.totalorder %v184, 0
      %v186 = vsel %vm185, %v184, 0
      %v187 = vshrl.u32 %v186, 5
      %v188 = vand.u32 %v186, 31
      %v189 = vsub.s32 32, %v188
      %v190 = vshrl.u32 683565275, %v189
      %v191 = vshll.u32 683565275, %v188
      %v192 = vshrl.u32 2475754826, %v189
      %v193 = vor.u32 %v191, %v192
      %v194 = vshll.u32 2475754826, %v188
      %v195 = vshrl.u32 2131351028, %v189
      %v196 = vor.u32 %v194, %v195
      %v197 = vshll.u32 2131351028, %v188
      %v198 = vshrl.u32 2102212464, %v189
      %v199 = vor.u32 %v197, %v198
      %v200 = vshll.u32 2102212464, %v188
      %v201 = vshrl.u32 920167782, %v189
      %v202 = vor.u32 %v200, %v201
      %v203 = vshll.u32 920167782, %v188
      %v204 = vshrl.u32 1326507024, %v189
      %v205 = vor.u32 %v203, %v204
      %vm206 = vcmp.lt.s32.totalorder %v187, 1
      %vm207 = vcmp.lt.s32.totalorder %v187, 2
      %vm208 = vcmp.lt.s32.totalorder %v187, 3
      %vm209 = vcmp.lt.s32.totalorder %v187, 4
      %v210 = vsel %vm206, %v190, %v193
      %v211 = vsel %vm209, %v199, 2102212464
      %v212 = vsel %vm208, %v196, %v211
      %v213 = vsel %vm207, %v210, %v212
      %v214 = vsel %vm206, %v193, %v196
      %v215 = vsel %vm209, %v202, 920167782
      %v216 = vsel %vm208, %v199, %v215
      %v217 = vsel %vm207, %v214, %v216
      %v218 = vsel %vm206, %v196, %v199
      %v219 = vsel %vm209, %v205, 1326507024
      %v220 = vsel %vm208, %v202, %v219
      %v221 = vsel %vm207, %v218, %v220
      %v222 = vshll.u32 %v182, 8
      %v223 = vmul.u32.u64.compose %v222, %v221
      %v224 = vextract.low.u32 %v223
      %v225 = vextract.high.u32 %v223
      %v226 = vmul.u32.u64.compose %v222, %v217
      %v227 = vextract.low.u32 %v226
      %v228 = vextract.high.u32 %v226
      %v229 = vmul.u32 %v222, %v213
      %v230 = vadd.s32 %v225, %v227
      %vm231 = vc.u32 %v225, %v227
      %v232 = vadd.s32 %v228, 1
      %v233 = vsel %vm231, %v232, %v228
      %v234 = vadd.s32 %v229, %v233
      %v235 = vadd.s32 %v234, 536870912
      %v236 = vshrl.u32 %v235, 30
      %v237 = vshll.u32 %v236, 30
      %v238 = vsub.s32 %v234, %v237
      %vm239 = vcmp.lt.s32.totalorder %v238, 0
      %v240 = vsub.s32 0, %v238
      %v241 = vsel %vm239, %v240, %v238
      %v242 = vclz %v241
      %v243 = vsub.s32 %v242, 2
      %vm244 = vcmp.gt.s32.totalorder 0, %v243
      %v245 = vsel %vm244, 0, %v243
      %v246 = vsub.s32 32, %v245
      %v247 = vshll.u32 %v238, %v245
      %v248 = vshrl.u32 %v230, %v246
      %v249 = vor.u32 %v247, %v248
      %v250 = vsub.s32 4294967266, %v245
      %v251 = vadd.s32 %v250, 127
      %v252 = vshll.u32 %v251, 23
      %v253 = vor.u32 4788187, %v252
      %v254 = vand.u32 2147483647, %v253
      %v256 = vcvt.s32.f32 %v249
      %v257 = vmul.f32 %v256, %v254
      %v258 = vxor.u32 %v257, 2147483648
      %v259 = vsel %vm176, %v258, %v257
      %v260 = vsub.s32 4, %v236
      %v261 = vsel %vm176, %v260, %v236
      %v262 = vsel %vm175, %v69, %v259
      %v263 = vsel %vm175, 0, %v261
      %v264 = vcosq.f32.pop %v262
      %v265 = vsinq.f32.pop %v262
      %vm266 = vweird.f32 %v69
      %v267 = vand.u32 %v263, 3
      %vm268 = vcmp.lt.s32.totalorder %v267, 2
      %vm269 = vcmp.eq.s32.totalorder %v267, 0
      %v270 = vxor.u32 %v265, 2147483648
      %v271 = vsel %vm269, %v264, %v270
      %vm272 = vcmp.eq.s32.totalorder %v267, 2
      %v273 = vxor.u32 %v264, 2147483648
      %v274 = vsel %vm272, %v273, %v265
      %v275 = vsel %vm268, %v271, %v274
      %v276 = vsel %vm266, nan, %v275
      %v277 = vld [vmem:[#allocation3] sm:$0xff]
      %v278 = vld [vmem:[#allocation3 + $0x8] sm:$0xff]
      %v279 = vld [vmem:[#allocation3 + $0x10] sm:$0xff]
      %v280 = vld [vmem:[#allocation3 + $0x18] sm:$0xff]
      %vm281 = vcmask 130048
      %v283 = vsel %vm281, %v276, 0
      %285 = vmatprep.subr.mxu0 0.0
      %286 = vmatpush1.msra.mxu0 0.0
      %287 = vmatprep.subr.mxu0 0.0
      %288 = vmatpush1.msra.mxu0 0.0
      %289 = vmatprep.subr.mxu0 0.0
      %290 = vmatpush1.msra.mxu0 0.0
      %291 = vmatprep.subr.mxu0 0.0
      %292 = vmatpush1.msra.mxu0 0.0
      %293 = vmatprep.subr.mxu0 0.0
      %294 = vmatpush1.msra.mxu0 0.0
      %295 = vmatprep.subr.mxu0 0.0
      %296 = vmatpush1.msra.mxu0 0.0
      %297 = vmatprep.subr.mxu0 0.0
      %298 = vmatpush1.msra.mxu0 0.0
      %299 = vmatprep.subr.mxu0 0.0
      %300 = vmatpush1.msra.mxu0 0.0
      %301 = vmatprep.subr.mxu0 0.0
      %302 = vmatpush1.msra.mxu0 0.0
      %303 = vmatprep.subr.mxu0 0.0
      %304 = vmatpush1.msra.mxu0 0.0
      %305 = vmatprep.subr.mxu0 0.0
      %306 = vmatpush1.msra.mxu0 0.0
      %307 = vmatprep.subr.mxu0 0.0
      %308 = vmatpush1.msra.mxu0 0.0
      %309 = vmatprep.subr.mxu0 0.0
      %310 = vmatpush1.msra.mxu0 0.0
      %311 = vmatprep.subr.mxu0 0.0
      %312 = vmatpush1.msra.mxu0 0.0
      %313 = vmatprep.subr.mxu0 0.0
      %314 = vmatpush1.msra.mxu0 %v280
      %315 = vmatprep.subr.mxu0 0.0
      %316 = vmatpush1.msra.mxu0 %v279
      %317 = vmatprep.subr.mxu0 0.0
      %318 = vmatpush2.msra.mxu0 0.0
      %319 = vmatprep.subr.mxu0 0.0
      %320 = vmatpush2.msra.mxu0 0.0
      %321 = vmatprep.subr.mxu0 0.0
      %322 = vmatpush2.msra.mxu0 0.0
      %323 = vmatprep.subr.mxu0 0.0
      %324 = vmatpush2.msra.mxu0 0.0
      %325 = vmatprep.subr.mxu0 0.0
      %326 = vmatpush2.msra.mxu0 0.0
      %327 = vmatprep.subr.mxu0 0.0
      %328 = vmatpush2.msra.mxu0 0.0
      %329 = vmatprep.subr.mxu0 0.0
      %330 = vmatpush2.msra.mxu0 0.0
      %331 = vmatprep.subr.mxu0 0.0
      %332 = vmatpush2.msra.mxu0 0.0
      %333 = vmatprep.subr.mxu0 0.0
      %334 = vmatpush2.msra.mxu0 0.0
      %335 = vmatprep.subr.mxu0 0.0
      %336 = vmatpush2.msra.mxu0 0.0
      %337 = vmatprep.subr.mxu0 0.0
      %338 = vmatpush2.msra.mxu0 0.0
      %339 = vmatprep.subr.mxu0 0.0
      %340 = vmatpush2.msra.mxu0 0.0
      %341 = vmatprep.subr.mxu0 0.0
      %342 = vmatpush2.msra.mxu0 0.0
      %343 = vmatprep.subr.mxu0 0.0
      %344 = vmatpush2.msra.mxu0 0.0
      %345 = vmatprep.subr.mxu0 0.0
      %346 = vmatpush2.msra.mxu0 0.0
      %347 = vmatprep.subr.mxu0 0.0
      %348 = vmatpush2.msra.mxu0 0.0
      %349 = vmatprep.mubr.f32.mxu0 0.0
      %350 = vmatmul.mubr.f32.gmra.mxu0 %v283
      %v351 = vpop.f32.mrf.mxu0
      %v352 = vadd.f32 0.0, %v351
      %v353 = vpop.f32.mrf.mxu0
      %354 = vdwg.mxu0
      %v356 = vsel %vm281, %v173, 0
      %358 = vmatprep.subr.mxu0 0.0
      %359 = vmatpush1.msra.mxu0 0.0
      %360 = vmatprep.subr.mxu0 0.0
      %361 = vmatpush1.msra.mxu0 0.0
      %362 = vmatprep.subr.mxu0 0.0
      %363 = vmatpush1.msra.mxu0 0.0
      %364 = vmatprep.subr.mxu0 0.0
      %365 = vmatpush1.msra.mxu0 0.0
      %366 = vmatprep.subr.mxu0 0.0
      %367 = vmatpush1.msra.mxu0 0.0
      %368 = vmatprep.subr.mxu0 0.0
      %369 = vmatpush1.msra.mxu0 0.0
      %370 = vmatprep.subr.mxu0 0.0
      %371 = vmatpush1.msra.mxu0 0.0
      %372 = vmatprep.subr.mxu0 0.0
      %373 = vmatpush1.msra.mxu0 0.0
      %374 = vmatprep.subr.mxu0 0.0
      %375 = vmatpush1.msra.mxu0 0.0
      %376 = vmatprep.subr.mxu0 0.0
      %377 = vmatpush1.msra.mxu0 0.0
      %378 = vmatprep.subr.mxu0 0.0
      %379 = vmatpush1.msra.mxu0 0.0
      %380 = vmatprep.subr.mxu0 0.0
      %381 = vmatpush1.msra.mxu0 0.0
      %382 = vmatprep.subr.mxu0 0.0
      %383 = vmatpush1.msra.mxu0 0.0
      %384 = vmatprep.subr.mxu0 0.0
      %385 = vmatpush1.msra.mxu0 0.0
      %386 = vmatprep.subr.mxu0 0.0
      %387 = vmatpush1.msra.mxu0 %v278
      %388 = vmatprep.subr.mxu0 0.0
      %389 = vmatpush1.msra.mxu0 %v277
      %390 = vmatprep.subr.mxu0 0.0
      %391 = vmatpush2.msra.mxu0 0.0
      %392 = vmatprep.subr.mxu0 0.0
      %393 = vmatpush2.msra.mxu0 0.0
      %394 = vmatprep.subr.mxu0 0.0
      %395 = vmatpush2.msra.mxu0 0.0
      %396 = vmatprep.subr.mxu0 0.0
      %397 = vmatpush2.msra.mxu0 0.0
      %398 = vmatprep.subr.mxu0 0.0
      %399 = vmatpush2.msra.mxu0 0.0
      %400 = vmatprep.subr.mxu0 0.0
      %401 = vmatpush2.msra.mxu0 0.0
      %402 = vmatprep.subr.mxu0 0.0
      %403 = vmatpush2.msra.mxu0 0.0
      %404 = vmatprep.subr.mxu0 0.0
      %405 = vmatpush2.msra.mxu0 0.0
      %406 = vmatprep.subr.mxu0 0.0
      %407 = vmatpush2.msra.mxu0 0.0
      %408 = vmatprep.subr.mxu0 0.0
      %409 = vmatpush2.msra.mxu0 0.0
      %410 = vmatprep.subr.mxu0 0.0
      %411 = vmatpush2.msra.mxu0 0.0
      %412 = vmatprep.subr.mxu0 0.0
      %413 = vmatpush2.msra.mxu0 0.0
      %414 = vmatprep.subr.mxu0 0.0
      %415 = vmatpush2.msra.mxu0 0.0
      %416 = vmatprep.subr.mxu0 0.0
      %417 = vmatpush2.msra.mxu0 0.0
      %418 = vmatprep.subr.mxu0 0.0
      %419 = vmatpush2.msra.mxu0 0.0
      %420 = vmatprep.subr.mxu0 0.0
      %421 = vmatpush2.msra.mxu0 0.0
      %422 = vmatprep.mubr.f32.mxu0 0.0
      %423 = vmatmul.mubr.f32.gmra.mxu0 %v356
      %v424 = vpop.f32.mrf.mxu0
      %v425 = vadd.f32 %v352, %v424
      %v426 = vpop.f32.mrf.mxu0
      %427 = vdwg.mxu0
      %v428 = vld [vmem:[%s3] sm:$0x1]
      %v430 = vlaneseq
      %v431 = vshrl.u32 %v430, 7
      %v432 = vsub.s32 0, %v431
      %v433 = vrot.slane %v428, %v432
      %v435 = vadd.f32 %v425, %v433
      %v436 = vxor.u32 %v435, 2147483648
      %v437 = vmul.f32 %v436, 1.442695
      %v438 = vpow.pop %v437
      %v439 = vadd.f32 %v438, 1.0
      %v440 = vrcp.pop %v439
      %v441 = vmul.f32 1.0, %v440
      %v442 = vmul.f32 %v435, %v441
      %443 = vst [vmem:[#allocation2] sm:$0xff] %v442
    $region37: #{tpu_custom_call.1} parent=1 // pred_fallthru
      _
    %v444 = vld [vmem:[#allocation2] sm:$0xff]
    %v445 = vld [vmem:[#allocation6] sm:$0xff]
    %v446 = vld [vmem:[#allocation6 + $0x8] sm:$0xff]
    %v447 = vld [vmem:[#allocation6 + $0x10] sm:$0xff]
    %v448 = vld [vmem:[#allocation6 + $0x18] sm:$0xff]
    %v449 = vld [vmem:[#allocation6 + $0x20] sm:$0xff]
    %v450 = vld [vmem:[#allocation6 + $0x28] sm:$0xff]
    %v451 = vld [vmem:[#allocation6 + $0x30] sm:$0xff]
    %v452 = vld [vmem:[#allocation6 + $0x38] sm:$0xff]
    %v453 = vld [vmem:[#allocation6 + $0x40] sm:$0xff]
    %v454 = vld [vmem:[#allocation6 + $0x48] sm:$0xff]
    %v455 = vld [vmem:[#allocation6 + $0x50] sm:$0xff]
    %v456 = vld [vmem:[#allocation6 + $0x58] sm:$0xff]
    %v457 = vld [vmem:[#allocation6 + $0x60] sm:$0xff]
    %v458 = vld [vmem:[#allocation6 + $0x68] sm:$0xff]
    %v459 = vld [vmem:[#allocation6 + $0x70] sm:$0xff]
    %v460 = vld [vmem:[#allocation6 + $0x78] sm:$0xff]
    %v461 = vld [vmem:[%s5] sm:$0x1]
    %v463 = vlaneseq
    %v464 = vshrl.u32 %v463, 7
    %v465 = vsub.s32 0, %v464
    %v466 = vrot.slane %v461, %v465
    %468 = vmatprep.subr.mxu0 0.0
    %469 = vmatpush1.msra.mxu0 %v460
    %470 = vmatprep.subr.mxu0 0.0
    %471 = vmatpush1.msra.mxu0 %v459
    %472 = vmatprep.subr.mxu0 0.0
    %473 = vmatpush1.msra.mxu0 %v458
    %474 = vmatprep.subr.mxu0 0.0
    %475 = vmatpush1.msra.mxu0 %v457
    %476 = vmatprep.subr.mxu0 0.0
    %477 = vmatpush1.msra.mxu0 %v456
    %478 = vmatprep.subr.mxu0 0.0
    %479 = vmatpush1.msra.mxu0 %v455
    %480 = vmatprep.subr.mxu0 0.0
    %481 = vmatpush1.msra.mxu0 %v454
    %482 = vmatprep.subr.mxu0 0.0
    %483 = vmatpush1.msra.mxu0 %v453
    %484 = vmatprep.subr.mxu0 0.0
    %485 = vmatpush1.msra.mxu0 %v452
    %486 = vmatprep.subr.mxu0 0.0
    %487 = vmatpush1.msra.mxu0 %v451
    %488 = vmatprep.subr.mxu0 0.0
    %489 = vmatpush1.msra.mxu0 %v450
    %490 = vmatprep.subr.mxu0 0.0
    %491 = vmatpush1.msra.mxu0 %v449
    %492 = vmatprep.subr.mxu0 0.0
    %493 = vmatpush1.msra.mxu0 %v448
    %494 = vmatprep.subr.mxu0 0.0
    %495 = vmatpush1.msra.mxu0 %v447
    %496 = vmatprep.subr.mxu0 0.0
    %497 = vmatpush1.msra.mxu0 %v446
    %498 = vmatprep.subr.mxu0 0.0
    %499 = vmatpush1.msra.mxu0 %v445
    %500 = vmatprep.subr.mxu0 0.0
    %501 = vmatpush2.msra.mxu0 0.0
    %502 = vmatprep.subr.mxu0 0.0
    %503 = vmatpush2.msra.mxu0 0.0
    %504 = vmatprep.subr.mxu0 0.0
    %505 = vmatpush2.msra.mxu0 0.0
    %506 = vmatprep.subr.mxu0 0.0
    %507 = vmatpush2.msra.mxu0 0.0
    %508 = vmatprep.subr.mxu0 0.0
    %509 = vmatpush2.msra.mxu0 0.0
    %510 = vmatprep.subr.mxu0 0.0
    %511 = vmatpush2.msra.mxu0 0.0
    %512 = vmatprep.subr.mxu0 0.0
    %513 = vmatpush2.msra.mxu0 0.0
    %514 = vmatprep.subr.mxu0 0.0
    %515 = vmatpush2.msra.mxu0 0.0
    %516 = vmatprep.subr.mxu0 0.0
    %517 = vmatpush2.msra.mxu0 0.0
    %518 = vmatprep.subr.mxu0 0.0
    %519 = vmatpush2.msra.mxu0 0.0
    %520 = vmatprep.subr.mxu0 0.0
    %521 = vmatpush2.msra.mxu0 0.0
    %522 = vmatprep.subr.mxu0 0.0
    %523 = vmatpush2.msra.mxu0 0.0
    %524 = vmatprep.subr.mxu0 0.0
    %525 = vmatpush2.msra.mxu0 0.0
    %526 = vmatprep.subr.mxu0 0.0
    %527 = vmatpush2.msra.mxu0 0.0
    %528 = vmatprep.subr.mxu0 0.0
    %529 = vmatpush2.msra.mxu0 0.0
    %530 = vmatprep.subr.mxu0 0.0
    %531 = vmatpush2.msra.mxu0 0.0
    %532 = vmatprep.mubr.f32.mxu0 0.0
    %533 = vmatmul.mubr.f32.gmra.mxu0 %v444
    %v534 = vpop.f32.mrf.mxu0
    %v535 = vadd.f32 %v466, %v534
    %v536 = vpop.f32.mrf.mxu0
    %537 = vdwg.mxu0
    %538 = vst [vmem:[#allocation8] sm:$0xff] %v535
    // Predicated region
    $region38: #{tpu_custom_call.1} parent=1 // pred_check
      _
    $region39: #{tpu_custom_call.1} parent=1 // pred_check_branch
      %540 = sbr.rel (0) target = $region41
    $region40: #{tpu_custom_call.1} parent=1 // pred_region
      %s542 = ssub.s32 128, 128
      %543 = vsyncadd [#allocation5], %s542
      %s545 = sshll.u32 [#allocation8], 4
      %s546 = int_to_ptr.vmem [resolvable:$true] %s545
      %548 = dma.vmem_to_hbm [thread:$0]  %s546, 128, %s6, [#allocation5]
    $region41: #{tpu_custom_call.1} parent=1 // pred_fallthru
      _
    // Predicated region
    $region42: #{tpu_custom_call.1} parent=1 // pred_check
      _
    $region43: #{tpu_custom_call.1} parent=1 // pred_check_branch
      %550 = sbr.rel (0) target = $region45
    $region44: #{tpu_custom_call.1} parent=1 // pred_region
      %551 = dma.done [#allocation5], 128
    $region45: #{tpu_custom_call.1} parent=1 // pred_fallthru
      _
    %552 = vsyncpa [#allocation4], 1
    %553 = vsyncpa [#allocation7], 1
    %554 = vsyncpa [#allocation5], 1

</llo_original>
